<compile_context>
chip_gen: v7x
topology: tpu7x:2x2x1
jax: 0.10.0
libtpu: 0.0.40
codegen_flags: <defaults>
</compile_context>

<pallas_src>
import functools

import jax
import jax.numpy as jnp
from jax.experimental import pallas as pl
from jax.experimental.pallas import tpu as pltpu


def _round_up(x, m):
    return (x + m - 1) // m * m


# ----------------------------------------------------------------------------
# Fused conv (as lane-dense matmul) + temporal max-pool kernel
# ----------------------------------------------------------------------------
def _fused_conv_pool_kernel(p_ref, w_ref, o_ref, *, pool_k):
    # p_ref: (1, pool_k, Kd, TR)  bf16  -- im2col patches for pool_k time taps
    # w_ref: (Cout, Kd)           bf16  -- flattened conv weight
    # o_ref: (1, Cout, TR)        f32   -- pooled conv potentials (lane-dense)
    w = w_ref[...]
    acc = jnp.dot(w, p_ref[0, 0], preferred_element_type=jnp.float32)
    for tap in range(1, pool_k):  # static, tiny (pooling_kernel)
        acc = jnp.maximum(
            acc, jnp.dot(w, p_ref[0, tap], preferred_element_type=jnp.float32))
    o_ref[...] = acc[None, :, :]


def fused_conv_pool(patches, w2, tile_rows):
    """patches: (To, pool_k, Kd, rows_p) bf16, w2: (Cout, Kd) bf16
    -> (To, Cout, rows_p) f32 (conv potentials max-pooled over time window)."""
    To, pk, Kd, rows_p = patches.shape
    Cout = w2.shape[0]
    kernel = functools.partial(_fused_conv_pool_kernel, pool_k=pk)
    return pl.pallas_call(
        kernel,
        out_shape=jax.ShapeDtypeStruct((To, Cout, rows_p), jnp.float32),
        grid=(To, rows_p // tile_rows),
        in_specs=[
            pl.BlockSpec((1, pk, Kd, tile_rows), lambda t, j: (t, 0, 0, j)),
            pl.BlockSpec((Cout, Kd), lambda t, j: (0, 0)),
        ],
        out_specs=pl.BlockSpec((1, Cout, tile_rows), lambda t, j: (t, 0, j)),
        compiler_params=pltpu.CompilerParams(
            dimension_semantics=("parallel", "parallel"),
            vmem_limit_bytes=32 * 1024 * 1024,
        ),
    )(patches, w2)


# ----------------------------------------------------------------------------
# One column: im2col (fused JAX slicing, time-major layout) + fused kernel
# ----------------------------------------------------------------------------
def conv_column_forward(x, weight, K, pool_k, stride=2):
    """x: (T, Cin, B, H, W), weight: (Cout, Cin, K, K)
    -> (To, Cout, B, Ho, Wo)  with To = T // pool_k (conv + temporal max-pool)."""
    T, Cin, B, H, W = x.shape
    Cout = weight.shape[0]
    Ho = (H - K) // stride + 1
    Wo = (W - K) // stride + 1
    To = T // pool_k

    x = x[:To * pool_k].astype(jnp.bfloat16)

    # im2col taps; ordering (Cin, kh, kw) matches weight.reshape(Cout, Cin*K*K).
    cols = []
    for kh in range(K):
        for kw in range(K):
            cols.append(
                x[:, :, :, kh:kh + stride * Ho:stride, kw:kw + stride * Wo:stride])
    p = jnp.stack(cols, axis=2)                      # (T, Cin, K*K, B, Ho, Wo)

    Kd = Cin * K * K
    rows = B * Ho * Wo
    p = p.reshape(To, pool_k, Kd, rows)              # no transpose needed

    tile_rows = 512 if rows >= 512 else _round_up(rows, 128)
    rows_p = _round_up(rows, tile_rows)
    if rows_p != rows:
        p = jnp.pad(p, ((0, 0), (0, 0), (0, 0), (0, rows_p - rows)))

    w2 = weight.reshape(Cout, Kd).astype(jnp.bfloat16)

    out = fused_conv_pool(p, w2, tile_rows)          # (To, Cout, rows_p) f32
    out = out[:, :, :rows].reshape(To, Cout, B, Ho, Wo)
    return out


# ----------------------------------------------------------------------------
# StackCV
# ----------------------------------------------------------------------------
class StackCVPallas:
    def __init__(self, channels, conv_kernel=3, pooling_kernel=2, key=None):
        self.conv_kernel = conv_kernel
        self.pooling_kernel = pooling_kernel
        self.num_spikes = len(channels) - 1
        key = jax.random.PRNGKey(0) if key is None else key
        keys = jax.random.split(key, self.num_spikes)
        self.weights = []
        for i in range(self.num_spikes):
            # Conv2d-style weight (C_out, C_in, K, K), deterministic init.
            w = 0.1 * jax.random.uniform(
                keys[i],
                (channels[i + 1], channels[i], conv_kernel, conv_kernel),
                dtype=jnp.float32,
            )
            self.weights.append(w)

    def __call__(self, input_spikes, depth=-1):
        # (B, C, H, W, T) -> time-major internal layout (T, C, B, H, W)
        x = jnp.transpose(input_spikes, (4, 1, 0, 2, 3))
        for column_i, w in enumerate(self.weights):
            x = conv_column_forward(x, w, self.conv_kernel, self.pooling_kernel)
            if column_i == depth:
                break
        # back to PyTorch layout (B, C, X, Y, T)
        return jnp.transpose(x, (2, 1, 3, 4, 0))


if __name__ == "__main__":
    key = jax.random.PRNGKey(0)
    k_spk, k_w = jax.random.split(key)

    # Small shapes: batch=2, channels=(4, 8, 16), spatial=16x16, time=8.
    B, C0, H, W, T = 2, 4, 16, 16, 8
    channels = (4, 8, 16)
    x = jax.random.bernoulli(k_spk, p=0.3, shape=(B, C0, H, W, T)).astype(jnp.float32)

    model = StackCVPallas(channels, conv_kernel=3, pooling_kernel=2, key=k_w)
    fwd = jax.jit(lambda inp: model(inp))
    out = fwd(x)
    out = jax.block_until_ready(out)

    # col0 -> conv (2,8,7,7,8) pooled to (2,8,7,7,4); col1 -> (2,16,3,3,4) pooled to (2,16,3,3,2)
    assert out.shape == (2, 16, 3, 3, 2), out.shape
    print("KERNEL_OK")
</pallas_src>

<mosaic_0001>
module attributes {stable_mosaic.version = 11 : i64} {
  func.func @_fused_conv_pool_kernel(%arg0: i32, %arg1: i32, %arg2: memref<1x2x36x128xbf16, #tpu.memory_space<vmem>>, %arg3: memref<8x36xbf16, #tpu.memory_space<vmem>>, %arg4: memref<1x8x128xf32, #tpu.memory_space<vmem>>) attributes {dimension_semantics = [#tpu.dimension_semantics<parallel>, #tpu.dimension_semantics<parallel>], iteration_bounds = array<i64: 4, 1>, scalar_prefetch = 0 : i64, scratch_operands = 0 : i64, tpu.core_type = #tpu.core_type<tc>, window_params = [{transform_indices = @transform_0, window_bounds = array<i64: 1, 2, 36, 128>}, {pipeline_mode = #tpu.pipeline_mode<synchronous>, transform_indices = @transform_1, window_bounds = array<i64: 8, 36>}, {transform_indices = @transform_2, window_bounds = array<i64: 1, 8, 128>}]} {
    %c0 = arith.constant 0 : index
    %c0_0 = arith.constant 0 : index
    %0 = vector.load %arg3[%c0, %c0_0] : memref<8x36xbf16, #tpu.memory_space<vmem>>, vector<8x36xbf16>
    %c0_1 = arith.constant 0 : index
    %c0_2 = arith.constant 0 : index
    %c0_3 = arith.constant 0 : index
    %c0_4 = arith.constant 0 : index
    %1 = vector.load %arg2[%c0_1, %c0_2, %c0_3, %c0_4] : memref<1x2x36x128xbf16, #tpu.memory_space<vmem>>, vector<1x1x36x128xbf16>
    %2 = vector.shape_cast %1 : vector<1x1x36x128xbf16> to vector<36x128xbf16>
    %cst = arith.constant dense<0.000000e+00> : vector<8x128xf32>
    %3 = tpu.matmul %0, %2, %cst {dimension_numbers = #tpu.dot_dimension_numbers<[1], [0], [0], [1], [0, 0, 1, 1], [], []>} : vector<8x36xbf16>, vector<36x128xbf16>, vector<8x128xf32> -> vector<8x128xf32>
    %c0_5 = arith.constant 0 : index
    %c1 = arith.constant 1 : index
    %c0_6 = arith.constant 0 : index
    %c0_7 = arith.constant 0 : index
    %4 = vector.load %arg2[%c0_5, %c1, %c0_6, %c0_7] : memref<1x2x36x128xbf16, #tpu.memory_space<vmem>>, vector<1x1x36x128xbf16>
    %5 = vector.shape_cast %4 : vector<1x1x36x128xbf16> to vector<36x128xbf16>
    %cst_8 = arith.constant dense<0.000000e+00> : vector<8x128xf32>
    %6 = tpu.matmul %0, %5, %cst_8 {dimension_numbers = #tpu.dot_dimension_numbers<[1], [0], [0], [1], [0, 0, 1, 1], [], []>} : vector<8x36xbf16>, vector<36x128xbf16>, vector<8x128xf32> -> vector<8x128xf32>
    %7 = arith.maximumf %3, %6 : vector<8x128xf32>
    %8 = vector.shape_cast %7 : vector<8x128xf32> to vector<1x8x128xf32>
    %c0_9 = arith.constant 0 : index
    %c0_10 = arith.constant 0 : index
    %c0_11 = arith.constant 0 : index
    %9 = vector.load %arg4[%c0_9, %c0_10, %c0_11] : memref<1x8x128xf32, #tpu.memory_space<vmem>>, vector<1x8x128xf32>
    tpu.vector_store %arg4[%c0_9, %c0_10, %c0_11], %8 {strides = array<i32>} : memref<1x8x128xf32, #tpu.memory_space<vmem>>, vector<1x8x128xf32>,
    return
  }
  func.func @transform_0(%arg0: i32, %arg1: i32) -> (i32, i32, i32, i32) {
    %c0_i32 = arith.constant 0 : i32
    %c0_i32_0 = arith.constant 0 : i32
    %c0_i32_1 = arith.constant 0 : i32
    return %arg0, %c0_i32, %c0_i32_0, %arg1 : i32, i32, i32, i32
  }
  func.func @transform_1(%arg0: i32, %arg1: i32) -> (i32, i32) {
    %c0_i32 = arith.constant 0 : i32
    %c0_i32_0 = arith.constant 0 : i32
    %c0_i32_1 = arith.constant 0 : i32
    return %c0_i32, %c0_i32_0 : i32, i32
  }
  func.func @transform_2(%arg0: i32, %arg1: i32) -> (i32, i32, i32) {
    %c0_i32 = arith.constant 0 : i32
    %c0_i32_0 = arith.constant 0 : i32
    return %arg0, %c0_i32, %arg1 : i32, i32, i32
  }
}

module attributes {stable_mosaic.version = 11 : i64} {
  func.func @_fused_conv_pool_kernel(%arg0: i32, %arg1: i32, %arg2: memref<1x2x72x128xbf16, #tpu.memory_space<vmem>>, %arg3: memref<16x72xbf16, #tpu.memory_space<vmem>>, %arg4: memref<1x16x128xf32, #tpu.memory_space<vmem>>) attributes {dimension_semantics = [#tpu.dimension_semantics<parallel>, #tpu.dimension_semantics<parallel>], iteration_bounds = array<i64: 2, 1>, scalar_prefetch = 0 : i64, scratch_operands = 0 : i64, tpu.core_type = #tpu.core_type<tc>, window_params = [{transform_indices = @transform_0, window_bounds = array<i64: 1, 2, 72, 128>}, {pipeline_mode = #tpu.pipeline_mode<synchronous>, transform_indices = @transform_1, window_bounds = array<i64: 16, 72>}, {transform_indices = @transform_2, window_bounds = array<i64: 1, 16, 128>}]} {
    %c0 = arith.constant 0 : index
    %c0_0 = arith.constant 0 : index
    %0 = vector.load %arg3[%c0, %c0_0] : memref<16x72xbf16, #tpu.memory_space<vmem>>, vector<16x72xbf16>
    %c0_1 = arith.constant 0 : index
    %c0_2 = arith.constant 0 : index
    %c0_3 = arith.constant 0 : index
    %c0_4 = arith.constant 0 : index
    %1 = vector.load %arg2[%c0_1, %c0_2, %c0_3, %c0_4] : memref<1x2x72x128xbf16, #tpu.memory_space<vmem>>, vector<1x1x72x128xbf16>
    %2 = vector.shape_cast %1 : vector<1x1x72x128xbf16> to vector<72x128xbf16>
    %cst = arith.constant dense<0.000000e+00> : vector<16x128xf32>
    %3 = tpu.matmul %0, %2, %cst {dimension_numbers = #tpu.dot_dimension_numbers<[1], [0], [0], [1], [0, 0, 1, 1], [], []>} : vector<16x72xbf16>, vector<72x128xbf16>, vector<16x128xf32> -> vector<16x128xf32>
    %c0_5 = arith.constant 0 : index
    %c1 = arith.constant 1 : index
    %c0_6 = arith.constant 0 : index
    %c0_7 = arith.constant 0 : index
    %4 = vector.load %arg2[%c0_5, %c1, %c0_6, %c0_7] : memref<1x2x72x128xbf16, #tpu.memory_space<vmem>>, vector<1x1x72x128xbf16>
    %5 = vector.shape_cast %4 : vector<1x1x72x128xbf16> to vector<72x128xbf16>
    %cst_8 = arith.constant dense<0.000000e+00> : vector<16x128xf32>
    %6 = tpu.matmul %0, %5, %cst_8 {dimension_numbers = #tpu.dot_dimension_numbers<[1], [0], [0], [1], [0, 0, 1, 1], [], []>} : vector<16x72xbf16>, vector<72x128xbf16>, vector<16x128xf32> -> vector<16x128xf32>
    %7 = arith.maximumf %3, %6 : vector<16x128xf32>
    %8 = vector.shape_cast %7 : vector<16x128xf32> to vector<1x16x128xf32>
    %c0_9 = arith.constant 0 : index
    %c0_10 = arith.constant 0 : index
    %c0_11 = arith.constant 0 : index
    %9 = vector.load %arg4[%c0_9, %c0_10, %c0_11] : memref<1x16x128xf32, #tpu.memory_space<vmem>>, vector<1x16x128xf32>
    tpu.vector_store %arg4[%c0_9, %c0_10, %c0_11], %8 {strides = array<i32>} : memref<1x16x128xf32, #tpu.memory_space<vmem>>, vector<1x16x128xf32>,
    return
  }
  func.func @transform_0(%arg0: i32, %arg1: i32) -> (i32, i32, i32, i32) {
    %c0_i32 = arith.constant 0 : i32
    %c0_i32_0 = arith.constant 0 : i32
    %c0_i32_1 = arith.constant 0 : i32
    return %arg0, %c0_i32, %c0_i32_0, %arg1 : i32, i32, i32, i32
  }
  func.func @transform_1(%arg0: i32, %arg1: i32) -> (i32, i32) {
    %c0_i32 = arith.constant 0 : i32
    %c0_i32_0 = arith.constant 0 : i32
    %c0_i32_1 = arith.constant 0 : i32
    return %c0_i32, %c0_i32_0 : i32, i32
  }
  func.func @transform_2(%arg0: i32, %arg1: i32) -> (i32, i32, i32) {
    %c0_i32 = arith.constant 0 : i32
    %c0_i32_0 = arith.constant 0 : i32
    return %arg0, %c0_i32, %arg1 : i32, i32, i32
  }
}

</mosaic_0001>

<llo_original>
// kernel: _lambda_.2
$region0: #{_lambda_.2}
  #allocation0 [shape = 'u32[]', space=smem, size = 0x4, offset = 0x4, fixed_abs, tag = 'smem constant byte address 0x4 - core index']
  #allocation1 [shape = 'u32[144,128]{1,0:T(1,128)}', space=vmem, size = 0x12000, scoped, tag = 'internal scratch']
  %s0 = inlined_call_operand.vmem [shape: bf16[4,2,36,128], index: 0, kind: input, shape index: {}]
  %s1 = inlined_call_operand.vmem [shape: bf16[8,36], index: 1, kind: input, shape index: {}]
  %s2 = inlined_call_operand.vmem [shape: f32[4,8,128], index: 2, kind: output, shape index: {}]
  %s3 = sld [smem:[#allocation0]]
  $region41: #{_lambda_.2} parent=0
    _
  %s5 = ssub.s32 1, %s3
  %s6 = scalar_select 0, %s5, %s3
  loop: start=0, step=1, limit=6
  $region2: #{_lambda_.2} parent=0 // loop_pre_header
    _
  $region3: #{_lambda_.2} parent=0 // loop_header
    %s8 = sphi 0, %s12
    %p9 = scmp.ge.s32.totalorder %s8, 6
    %s15 = sphi 0, %s27
    %s16 = sphi 0, %s23
    %s17 = sphi 0, %s15
    %s18 = sphi 0, %s16
    %s19 = sphi 0, %s17
    %s20 = sphi 0, %s18
    %s32 = sphi 0, %s34
    %s35 = sphi 0, %s32
    %s36 = sphi 0, %s35
    %s52 = sphi 0, %s36
    %s56 = sphi 0, %s56
    %s58 = sphi 0, %s56
    %s59 = sphi 0, %s58
    %s73 = sphi 0, %s59
    %s81 = sphi 0, %s83
    %s84 = sphi 0, %s81
    %s85 = sphi 0, %s84
    %s101 = sphi 0, %s85
  $region4: #{_lambda_.2} parent=0 // loop_header_branch
    %11 = sbr.rel (%p9) target = $region8
  $region5: #{_lambda_.2} parent=0 // loop_body
    %s13 = ssub.s32 %s8, 1
    %s14 = ssub.s32 %s8, 2
    %s21 = sadd.s32 1, %s16
    %p22 = scmp.ge.s32.totalorder %s21, 1
    %s23 = scalar_select %p22, 0, %s21
    %s24 = sadd.s32 1, %s15
    %s25 = scalar_select %p22, %s24, %s15
    %p26 = scmp.ge.s32.totalorder %s25, 4
    %s27 = scalar_select %p26, 0, %s25
    %s28 = ssub.s32 %s15, %s27
    %s29 = ssub.s32 %s16, %s23
    %s30 = sor.u32 %s28, %s29
    %p31 = scmp.eq.s32.totalorder %s30, 0
    %s33 = sadd.s32 %s32, 1
    %s34 = scalar_select %p31, %s32, %s33
    %p37 = pneg %p31
    %p38 = scmp.eq.s32.totalorder %s8, 3
    %p39 = por %p37, %p38
    %p40 = scmp.ne.s32.totalorder %s32, %s35
    %p41 = scmp.eq.s32.totalorder %s8, 0
    %p42 = por %p40, %p41
    %p43 = scmp.ne.s32.totalorder %s32, %s35
    %p44 = scmp.eq.s32.totalorder %s13, 3
    %p45 = por %p43, %p44
    %p46 = scmp.ne.s32.totalorder %s35, %s36
    %p47 = scmp.eq.s32.totalorder %s13, 0
    %p48 = por %p46, %p47
    %p49 = scmp.ne.s32.totalorder %s35, %s36
    %p50 = scmp.eq.s32.totalorder %s14, 3
    %p51 = por %p49, %p50
    %p53 = scmp.ne.s32.totalorder %s36, %s52
    %p54 = scmp.eq.s32.totalorder %s14, 0
    %p55 = por %p53, %p54
    %s57 = sadd.s32 %s56, 1
    %p60 = scmp.eq.s32.totalorder %s8, 3
    %p61 = scmp.ne.s32.totalorder %s56, %s58
    %p62 = scmp.eq.s32.totalorder %s8, 0
    %p63 = por %p61, %p62
    %p64 = scmp.ne.s32.totalorder %s56, %s58
    %p65 = scmp.eq.s32.totalorder %s13, 3
    %p66 = por %p64, %p65
    %p67 = scmp.ne.s32.totalorder %s58, %s59
    %p68 = scmp.eq.s32.totalorder %s13, 0
    %p69 = por %p67, %p68
    %p70 = scmp.ne.s32.totalorder %s58, %s59
    %p71 = scmp.eq.s32.totalorder %s14, 3
    %p72 = por %p70, %p71
    %p74 = scmp.ne.s32.totalorder %s59, %s73
    %p75 = scmp.eq.s32.totalorder %s14, 0
    %p76 = por %p74, %p75
    %s77 = ssub.s32 %s15, %s27
    %s78 = ssub.s32 %s16, %s23
    %s79 = sor.u32 %s77, %s78
    %p80 = scmp.eq.s32.totalorder %s79, 0
    %s82 = sadd.s32 %s81, 1
    %s83 = scalar_select %p80, %s81, %s82
    %p86 = pneg %p80
    %p87 = scmp.eq.s32.totalorder %s8, 3
    %p88 = por %p86, %p87
    %p89 = scmp.ne.s32.totalorder %s81, %s84
    %p90 = scmp.eq.s32.totalorder %s8, 0
    %p91 = por %p89, %p90
    %p92 = scmp.ne.s32.totalorder %s81, %s84
    %p93 = scmp.eq.s32.totalorder %s13, 3
    %p94 = por %p92, %p93
    %p95 = scmp.ne.s32.totalorder %s84, %s85
    %p96 = scmp.eq.s32.totalorder %s13, 0
    %p97 = por %p95, %p96
    %p98 = scmp.ne.s32.totalorder %s84, %s85
    %p99 = scmp.eq.s32.totalorder %s14, 3
    %p100 = por %p98, %p99
    %p102 = scmp.ne.s32.totalorder %s85, %s101
    %p103 = scmp.eq.s32.totalorder %s14, 0
    %p104 = por %p102, %p103
    %p105 = scmp.le.s32.totalorder 1, %s8
    %p106 = scmp.lt.s32.totalorder %s8, 5
    %p107 = pnand %p105, %p106
    %p108 = pneg %p107
    // Predicated region
    $region9: #{_lambda_.2} parent=5 // pred_check
      _
    $region10: #{_lambda_.2} parent=5 // pred_check_branch
      %110 = sbr.rel (%p107) target = $region12
    $region11: #{_lambda_.2} parent=5 // pred_region
      %s111 = ssub.s32 %s8, 1
      // Predicated region
      $region13: #{_lambda_.2} parent=11 // pred_check
        %p112 = pneg %p69
      $region14: #{_lambda_.2} parent=11 // pred_check_branch
        %114 = sbr.rel (%p112) target = $region16
      $region15: #{_lambda_.2} parent=11 // pred_region
        _
      $region16: #{_lambda_.2} parent=11 // pred_fallthru
        _
    $region12: #{_lambda_.2} parent=5 // pred_fallthru
      _
    %p115 = scmp.lt.s32.totalorder %s8, 4
    // Predicated region
    $region17: #{_lambda_.2} parent=5 // pred_check
      %p116 = pneg %p115
    $region18: #{_lambda_.2} parent=5 // pred_check_branch
      %118 = sbr.rel (%p116) target = $region20
    $region19: #{_lambda_.2} parent=5 // pred_region
      // Predicated region
      $region21: #{_lambda_.2} parent=19 // pred_check
        %p119 = pneg %p42
      $region22: #{_lambda_.2} parent=19 // pred_check_branch
        %121 = sbr.rel (%p119) target = $region24
      $region23: #{_lambda_.2} parent=19 // pred_region
        %p122 = scmp.lt.s32.totalorder %s15, 3
        %s123 = scalar_select %p122, %s15, 3
        %p124 = scmp.lt.s32.totalorder %s16, 0
        %s125 = scalar_select %p124, %s16, 0
        %s126 = smul.addr %s123, 10
        %s127 = sadd.s32 %s125, %s126
        %s128 = smul.addr %s127, 4
        %s129 = scalar_lea.vmem %s0, %s128
      $region24: #{_lambda_.2} parent=19 // pred_fallthru
        _
    $region20: #{_lambda_.2} parent=5 // pred_fallthru
      _
    %p130 = scmp.le.s32.totalorder 1, %s8
    %p131 = scmp.lt.s32.totalorder %s8, 5
    %p132 = pnand %p130, %p131
    %p133 = pneg %p132
    // Predicated region
    $region25: #{_lambda_.2} parent=5 // pred_check
      _
    $region26: #{_lambda_.2} parent=5 // pred_check_branch
      %135 = sbr.rel (%p132) target = $region28
    $region27: #{_lambda_.2} parent=5 // pred_region
      %s136 = ssub.s32 %s8, 1
      %p137 = scmp.lt.s32.totalorder %s17, 3
      %s138 = scalar_select %p137, %s17, 3
      %p139 = scmp.lt.s32.totalorder %s18, 0
      %s140 = scalar_select %p139, %s18, 0
      %s141 = smul.addr %s138, 10
      %s142 = sadd.s32 %s140, %s141
      %s143 = smul.addr %s142, 4
      %s144 = scalar_lea.vmem %s0, %s143
      %p145 = pneg %p48
      %p146 = pneg %p45
      %p147 = pneg %p69
      %p148 = pneg %p66
      %p149 = pneg %p97
      %p150 = pneg %p94
      %p151 = scmp.lt.s32.totalorder %s17, 3
      %s152 = scalar_select %p151, %s17, 3
      %p153 = scmp.lt.s32.totalorder %s18, 0
      %s154 = scalar_select %p153, %s18, 0
      %s155 = sadd.s32 %s154, %s152
      %s156 = smul.addr %s155, 8
      %s157 = scalar_lea.vmem %s2, %s156
      %p158 = scmp.lt.s32.totalorder %s17, 3
      %s159 = scalar_select %p158, %s17, 3
      %p160 = scmp.lt.s32.totalorder %s18, 0
      %s161 = scalar_select %p160, %s18, 0
      %s162 = smul.addr %s159, 10
      %s163 = sadd.s32 %s161, %s162
      %s164 = smul.addr %s163, 4
      %s165 = scalar_lea.vmem %s0, %s164
      %p166 = scmp.lt.s32.totalorder %s17, 3
      %s167 = scalar_select %p166, %s17, 3
      %p168 = scmp.lt.s32.totalorder %s18, 0
      %s169 = scalar_select %p168, %s18, 0
      %s170 = sadd.s32 %s169, %s167
      %s171 = smul.addr %s170, 8
      %s172 = scalar_lea.vmem %s2, %s171
      %v174 = vld [vmem:[%s1] sm:$0xf]
      %v175 = vld [vmem:[%s165] sm:$0xf]
      %v176 = vld [vmem:[%s165 + $0x4] sm:$0xf]
      %v177 = vld [vmem:[%s165 + $0x8] sm:$0xf]
      %v178 = vld [vmem:[%s165 + $0xc] sm:$0xf]
      %v179 = vld [vmem:[%s165 + $0x10] sm:$0x3]
      %v185 = vunpack.c.l.b16 %v175
      %v186 = vunpack.c.l.b16 %v176
      %v187 = vunpack.c.l.b16 %v177
      %v188 = vunpack.c.l.b16 %v178
      %v189 = vunpack.c.l.b16 %v179
      %v190 = vpack.c.b16 %v186, %v185
      %v191 = vpack.c.b16 %v188, %v187
      %v192 = vpack.c.b16 %v189, %v189
      %vm195 = vcmask 293888
      %v197 = vsel %vm195, %v174, 0
      %vm199 = vcmask 1041408
      %v201 = vsel %vm199, %v192, 0
      %203 = vmatprep.subr.bf16.mxu0 0
      %204 = vmatpush1.bf16.msra.mxu0 %v190
      %205 = vmatprep.subr.bf16.mxu0 0
      %206 = vmatpush1.bf16.msra.mxu0 %v191
      %207 = vmatprep.subr.bf16.mxu0 0
      %208 = vmatpush1.bf16.msra.mxu0 %v201
      %209 = vmatprep.subr.bf16.mxu0 0
      %210 = vmatpush1.bf16.msra.mxu0 0
      %211 = vmatprep.subr.bf16.mxu0 0
      %212 = vmatpush1.bf16.msra.mxu0 0
      %213 = vmatprep.subr.bf16.mxu0 0
      %214 = vmatpush1.bf16.msra.mxu0 0
      %215 = vmatprep.subr.bf16.mxu0 0
      %216 = vmatpush1.bf16.msra.mxu0 0
      %217 = vmatprep.subr.bf16.mxu0 0
      %218 = vmatpush1.bf16.msra.mxu0 0
      %219 = vmatprep.subr.bf16.mxu0 0
      %220 = vmatpush1.bf16.msra.mxu0 0
      %221 = vmatprep.subr.bf16.mxu0 0
      %222 = vmatpush1.bf16.msra.mxu0 0
      %223 = vmatprep.subr.bf16.mxu0 0
      %224 = vmatpush1.bf16.msra.mxu0 0
      %225 = vmatprep.subr.bf16.mxu0 0
      %226 = vmatpush1.bf16.msra.mxu0 0
      %227 = vmatprep.subr.bf16.mxu0 0
      %228 = vmatpush1.bf16.msra.mxu0 0
      %229 = vmatprep.subr.bf16.mxu0 0
      %230 = vmatpush1.bf16.msra.mxu0 0
      %231 = vmatprep.subr.bf16.mxu0 0
      %232 = vmatpush1.bf16.msra.mxu0 0
      %233 = vmatprep.subr.bf16.mxu0 0
      %234 = vmatpush1.bf16.msra.mxu0 0
      %235 = vmatprep.mubr.bf16.mxu0 0
      %236 = vmatmul.mubr.bf16.gmra.mrb[0].mxu0 %v197
      %v237 = vpop.f32.mrb[0].mxu0
      %v238 = vadd.f32 0.0, %v237
      %v239 = vpop.f32.mrb[0].mxu0
      %v240 = vpop.f32.mrb[0].mxu0
      %v241 = vpop.f32.mrb[0].mxu0
      %242 = vdwg.mxu0
      %s243 = scalar_lea.vmem %s165, 20
      %v244 = vld [vmem:[%s243] sm:$0xf]
      %v245 = vld [vmem:[%s243 + $0x4] sm:$0xf]
      %v246 = vld [vmem:[%s243 + $0x8] sm:$0xf]
      %v247 = vld [vmem:[%s243 + $0xc] sm:$0xf]
      %v248 = vld [vmem:[%s243 + $0x10] sm:$0x3]
      %v254 = vunpack.c.l.b16 %v244
      %v255 = vunpack.c.l.b16 %v245
      %v256 = vunpack.c.l.b16 %v246
      %v257 = vunpack.c.l.b16 %v247
      %v258 = vunpack.c.l.b16 %v248
      %v259 = vpack.c.b16 %v255, %v254
      %v260 = vpack.c.b16 %v257, %v256
      %v261 = vpack.c.b16 %v258, %v258
      %v265 = vsel %vm199, %v261, 0
      %267 = vmatprep.subr.bf16.mxu0 0
      %268 = vmatpush1.bf16.msra.mxu0 %v259
      %269 = vmatprep.subr.bf16.mxu0 0
      %270 = vmatpush1.bf16.msra.mxu0 %v260
      %271 = vmatprep.subr.bf16.mxu0 0
      %272 = vmatpush1.bf16.msra.mxu0 %v265
      %273 = vmatprep.subr.bf16.mxu0 0
      %274 = vmatpush1.bf16.msra.mxu0 0
      %275 = vmatprep.subr.bf16.mxu0 0
      %276 = vmatpush1.bf16.msra.mxu0 0
      %277 = vmatprep.subr.bf16.mxu0 0
      %278 = vmatpush1.bf16.msra.mxu0 0
      %279 = vmatprep.subr.bf16.mxu0 0
      %280 = vmatpush1.bf16.msra.mxu0 0
      %281 = vmatprep.subr.bf16.mxu0 0
      %282 = vmatpush1.bf16.msra.mxu0 0
      %283 = vmatprep.subr.bf16.mxu0 0
      %284 = vmatpush1.bf16.msra.mxu0 0
      %285 = vmatprep.subr.bf16.mxu0 0
      %286 = vmatpush1.bf16.msra.mxu0 0
      %287 = vmatprep.subr.bf16.mxu0 0
      %288 = vmatpush1.bf16.msra.mxu0 0
      %289 = vmatprep.subr.bf16.mxu0 0
      %290 = vmatpush1.bf16.msra.mxu0 0
      %291 = vmatprep.subr.bf16.mxu0 0
      %292 = vmatpush1.bf16.msra.mxu0 0
      %293 = vmatprep.subr.bf16.mxu0 0
      %294 = vmatpush1.bf16.msra.mxu0 0
      %295 = vmatprep.subr.bf16.mxu0 0
      %296 = vmatpush1.bf16.msra.mxu0 0
      %297 = vmatprep.subr.bf16.mxu0 0
      %298 = vmatpush1.bf16.msra.mxu0 0
      %299 = vmatprep.mubr.bf16.mxu0 0
      %300 = vmatmul.mubr.bf16.gmra.mrb[0].mxu0 %v197
      %v301 = vpop.f32.mrb[0].mxu0
      %v302 = vadd.f32 0.0, %v301
      %v303 = vpop.f32.mrb[0].mxu0
      %v304 = vpop.f32.mrb[0].mxu0
      %v305 = vpop.f32.mrb[0].mxu0
      %306 = vdwg.mxu0
      %v307 = vmax.f32 %v238, %v302
      %308 = vst [vmem:[%s172] sm:$0xff] %v307
      %p309 = scmp.lt.s32.totalorder %s17, 3
      %s310 = scalar_select %p309, %s17, 3
      %p311 = scmp.lt.s32.totalorder %s18, 0
      %s312 = scalar_select %p311, %s18, 0
      %s313 = sadd.s32 %s312, %s310
      %s314 = smul.addr %s313, 8
      %s315 = scalar_lea.vmem %s2, %s314
      // Predicated region
      $region29: #{_lambda_.2} parent=27 // pred_check
        %p316 = pneg %p94
      $region30: #{_lambda_.2} parent=27 // pred_check_branch
        %318 = sbr.rel (%p316) target = $region32
      $region31: #{_lambda_.2} parent=27 // pred_region
        _
      $region32: #{_lambda_.2} parent=27 // pred_fallthru
        _
    $region28: #{_lambda_.2} parent=5 // pred_fallthru
      _
    %p319 = scmp.le.s32.totalorder 2, %s8
    // Predicated region
    $region33: #{_lambda_.2} parent=5 // pred_check
      %p320 = pneg %p319
    $region34: #{_lambda_.2} parent=5 // pred_check_branch
      %322 = sbr.rel (%p320) target = $region36
    $region35: #{_lambda_.2} parent=5 // pred_region
      %s323 = ssub.s32 %s8, 2
      // Predicated region
      $region37: #{_lambda_.2} parent=35 // pred_check
        %p324 = pneg %p100
      $region38: #{_lambda_.2} parent=35 // pred_check_branch
        %326 = sbr.rel (%p324) target = $region40
      $region39: #{_lambda_.2} parent=35 // pred_region
        %p327 = scmp.lt.s32.totalorder %s19, 3
        %s328 = scalar_select %p327, %s19, 3
        %p329 = scmp.lt.s32.totalorder %s20, 0
        %s330 = scalar_select %p329, %s20, 0
        %s331 = sadd.s32 %s330, %s328
        %s332 = smul.addr %s331, 8
        %s333 = scalar_lea.vmem %s2, %s332
      $region40: #{_lambda_.2} parent=35 // pred_fallthru
        _
    $region36: #{_lambda_.2} parent=5 // pred_fallthru
      _
  $region6: #{_lambda_.2} parent=0 // loop_footer
    %s12 = sadd.s32 1, %s8
  $region7: #{_lambda_.2} parent=0 // loop_footer_branch
    %7 = sbr.rel target = $region3
  $region8: #{_lambda_.2} parent=0 // loop_exit
    _

// kernel: _lambda_.3
$region0: #{_lambda_.3}
  #allocation0 [shape = 'u32[]', space=smem, size = 0x4, offset = 0x4, fixed_abs, tag = 'smem constant byte address 0x4 - core index']
  #allocation1 [shape = 'u32[144,128]{1,0:T(1,128)}', space=vmem, size = 0x12000, scoped, tag = 'internal scratch']
  %s0 = inlined_call_operand.vmem [shape: bf16[2,2,72,128], index: 0, kind: input, shape index: {}]
  %s1 = inlined_call_operand.vmem [shape: bf16[16,72], index: 1, kind: input, shape index: {}]
  %s2 = inlined_call_operand.vmem [shape: f32[2,16,128], index: 2, kind: output, shape index: {}]
  %s3 = sld [smem:[#allocation0]]
  $region41: #{_lambda_.3} parent=0
    _
  %s5 = ssub.s32 1, %s3
  %s6 = scalar_select 0, %s5, %s3
  loop: start=0, step=1, limit=4
  $region2: #{_lambda_.3} parent=0 // loop_pre_header
    _
  $region3: #{_lambda_.3} parent=0 // loop_header
    %s8 = sphi 0, %s12
    %p9 = scmp.ge.s32.totalorder %s8, 4
    %s15 = sphi 0, %s27
    %s16 = sphi 0, %s23
    %s17 = sphi 0, %s15
    %s18 = sphi 0, %s16
    %s19 = sphi 0, %s17
    %s20 = sphi 0, %s18
    %s32 = sphi 0, %s34
    %s35 = sphi 0, %s32
    %s36 = sphi 0, %s35
    %s52 = sphi 0, %s36
    %s56 = sphi 0, %s56
    %s58 = sphi 0, %s56
    %s59 = sphi 0, %s58
    %s73 = sphi 0, %s59
    %s81 = sphi 0, %s83
    %s84 = sphi 0, %s81
    %s85 = sphi 0, %s84
    %s101 = sphi 0, %s85
  $region4: #{_lambda_.3} parent=0 // loop_header_branch
    %11 = sbr.rel (%p9) target = $region8
  $region5: #{_lambda_.3} parent=0 // loop_body
    %s13 = ssub.s32 %s8, 1
    %s14 = ssub.s32 %s8, 2
    %s21 = sadd.s32 1, %s16
    %p22 = scmp.ge.s32.totalorder %s21, 1
    %s23 = scalar_select %p22, 0, %s21
    %s24 = sadd.s32 1, %s15
    %s25 = scalar_select %p22, %s24, %s15
    %p26 = scmp.ge.s32.totalorder %s25, 2
    %s27 = scalar_select %p26, 0, %s25
    %s28 = ssub.s32 %s15, %s27
    %s29 = ssub.s32 %s16, %s23
    %s30 = sor.u32 %s28, %s29
    %p31 = scmp.eq.s32.totalorder %s30, 0
    %s33 = sadd.s32 %s32, 1
    %s34 = scalar_select %p31, %s32, %s33
    %p37 = pneg %p31
    %p38 = scmp.eq.s32.totalorder %s8, 1
    %p39 = por %p37, %p38
    %p40 = scmp.ne.s32.totalorder %s32, %s35
    %p41 = scmp.eq.s32.totalorder %s8, 0
    %p42 = por %p40, %p41
    %p43 = scmp.ne.s32.totalorder %s32, %s35
    %p44 = scmp.eq.s32.totalorder %s13, 1
    %p45 = por %p43, %p44
    %p46 = scmp.ne.s32.totalorder %s35, %s36
    %p47 = scmp.eq.s32.totalorder %s13, 0
    %p48 = por %p46, %p47
    %p49 = scmp.ne.s32.totalorder %s35, %s36
    %p50 = scmp.eq.s32.totalorder %s14, 1
    %p51 = por %p49, %p50
    %p53 = scmp.ne.s32.totalorder %s36, %s52
    %p54 = scmp.eq.s32.totalorder %s14, 0
    %p55 = por %p53, %p54
    %s57 = sadd.s32 %s56, 1
    %p60 = scmp.eq.s32.totalorder %s8, 1
    %p61 = scmp.ne.s32.totalorder %s56, %s58
    %p62 = scmp.eq.s32.totalorder %s8, 0
    %p63 = por %p61, %p62
    %p64 = scmp.ne.s32.totalorder %s56, %s58
    %p65 = scmp.eq.s32.totalorder %s13, 1
    %p66 = por %p64, %p65
    %p67 = scmp.ne.s32.totalorder %s58, %s59
    %p68 = scmp.eq.s32.totalorder %s13, 0
    %p69 = por %p67, %p68
    %p70 = scmp.ne.s32.totalorder %s58, %s59
    %p71 = scmp.eq.s32.totalorder %s14, 1
    %p72 = por %p70, %p71
    %p74 = scmp.ne.s32.totalorder %s59, %s73
    %p75 = scmp.eq.s32.totalorder %s14, 0
    %p76 = por %p74, %p75
    %s77 = ssub.s32 %s15, %s27
    %s78 = ssub.s32 %s16, %s23
    %s79 = sor.u32 %s77, %s78
    %p80 = scmp.eq.s32.totalorder %s79, 0
    %s82 = sadd.s32 %s81, 1
    %s83 = scalar_select %p80, %s81, %s82
    %p86 = pneg %p80
    %p87 = scmp.eq.s32.totalorder %s8, 1
    %p88 = por %p86, %p87
    %p89 = scmp.ne.s32.totalorder %s81, %s84
    %p90 = scmp.eq.s32.totalorder %s8, 0
    %p91 = por %p89, %p90
    %p92 = scmp.ne.s32.totalorder %s81, %s84
    %p93 = scmp.eq.s32.totalorder %s13, 1
    %p94 = por %p92, %p93
    %p95 = scmp.ne.s32.totalorder %s84, %s85
    %p96 = scmp.eq.s32.totalorder %s13, 0
    %p97 = por %p95, %p96
    %p98 = scmp.ne.s32.totalorder %s84, %s85
    %p99 = scmp.eq.s32.totalorder %s14, 1
    %p100 = por %p98, %p99
    %p102 = scmp.ne.s32.totalorder %s85, %s101
    %p103 = scmp.eq.s32.totalorder %s14, 0
    %p104 = por %p102, %p103
    %p105 = scmp.le.s32.totalorder 1, %s8
    %p106 = scmp.lt.s32.totalorder %s8, 3
    %p107 = pnand %p105, %p106
    %p108 = pneg %p107
    // Predicated region
    $region9: #{_lambda_.3} parent=5 // pred_check
      _
    $region10: #{_lambda_.3} parent=5 // pred_check_branch
      %110 = sbr.rel (%p107) target = $region12
    $region11: #{_lambda_.3} parent=5 // pred_region
      %s111 = ssub.s32 %s8, 1
      // Predicated region
      $region13: #{_lambda_.3} parent=11 // pred_check
        %p112 = pneg %p69
      $region14: #{_lambda_.3} parent=11 // pred_check_branch
        %114 = sbr.rel (%p112) target = $region16
      $region15: #{_lambda_.3} parent=11 // pred_region
        _
      $region16: #{_lambda_.3} parent=11 // pred_fallthru
        _
    $region12: #{_lambda_.3} parent=5 // pred_fallthru
      _
    %p115 = scmp.lt.s32.totalorder %s8, 2
    // Predicated region
    $region17: #{_lambda_.3} parent=5 // pred_check
      %p116 = pneg %p115
    $region18: #{_lambda_.3} parent=5 // pred_check_branch
      %118 = sbr.rel (%p116) target = $region20
    $region19: #{_lambda_.3} parent=5 // pred_region
      // Predicated region
      $region21: #{_lambda_.3} parent=19 // pred_check
        %p119 = pneg %p42
      $region22: #{_lambda_.3} parent=19 // pred_check_branch
        %121 = sbr.rel (%p119) target = $region24
      $region23: #{_lambda_.3} parent=19 // pred_region
        %p122 = scmp.lt.s32.totalorder %s15, 1
        %s123 = scalar_select %p122, %s15, 1
        %p124 = scmp.lt.s32.totalorder %s16, 0
        %s125 = scalar_select %p124, %s16, 0
        %s126 = smul.addr %s123, 18
        %s127 = sadd.s32 %s125, %s126
        %s128 = smul.addr %s127, 4
        %s129 = scalar_lea.vmem %s0, %s128
      $region24: #{_lambda_.3} parent=19 // pred_fallthru
        _
    $region20: #{_lambda_.3} parent=5 // pred_fallthru
      _
    %p130 = scmp.le.s32.totalorder 1, %s8
    %p131 = scmp.lt.s32.totalorder %s8, 3
    %p132 = pnand %p130, %p131
    %p133 = pneg %p132
    // Predicated region
    $region25: #{_lambda_.3} parent=5 // pred_check
      _
    $region26: #{_lambda_.3} parent=5 // pred_check_branch
      %135 = sbr.rel (%p132) target = $region28
    $region27: #{_lambda_.3} parent=5 // pred_region
      %s136 = ssub.s32 %s8, 1
      %p137 = scmp.lt.s32.totalorder %s17, 1
      %s138 = scalar_select %p137, %s17, 1
      %p139 = scmp.lt.s32.totalorder %s18, 0
      %s140 = scalar_select %p139, %s18, 0
      %s141 = smul.addr %s138, 18
      %s142 = sadd.s32 %s140, %s141
      %s143 = smul.addr %s142, 4
      %s144 = scalar_lea.vmem %s0, %s143
      %p145 = pneg %p48
      %p146 = pneg %p45
      %p147 = pneg %p69
      %p148 = pneg %p66
      %p149 = pneg %p97
      %p150 = pneg %p94
      %p151 = scmp.lt.s32.totalorder %s17, 1
      %s152 = scalar_select %p151, %s17, 1
      %p153 = scmp.lt.s32.totalorder %s18, 0
      %s154 = scalar_select %p153, %s18, 0
      %s155 = smul.addr %s152, 2
      %s156 = sadd.s32 %s154, %s155
      %s157 = smul.addr %s156, 8
      %s158 = scalar_lea.vmem %s2, %s157
      %p159 = scmp.lt.s32.totalorder %s17, 1
      %s160 = scalar_select %p159, %s17, 1
      %p161 = scmp.lt.s32.totalorder %s18, 0
      %s162 = scalar_select %p161, %s18, 0
      %s163 = smul.addr %s160, 18
      %s164 = sadd.s32 %s162, %s163
      %s165 = smul.addr %s164, 4
      %s166 = scalar_lea.vmem %s0, %s165
      %p167 = scmp.lt.s32.totalorder %s17, 1
      %s168 = scalar_select %p167, %s17, 1
      %p169 = scmp.lt.s32.totalorder %s18, 0
      %s170 = scalar_select %p169, %s18, 0
      %s171 = smul.addr %s168, 2
      %s172 = sadd.s32 %s170, %s171
      %s173 = smul.addr %s172, 8
      %s174 = scalar_lea.vmem %s2, %s173
      %v176 = vld [vmem:[%s1] sm:$0xf]
      %v177 = vld [vmem:[%s1 + $0x4] sm:$0xf]
      %v178 = vld [vmem:[%s166] sm:$0xf]
      %v179 = vld [vmem:[%s166 + $0x4] sm:$0xf]
      %v180 = vld [vmem:[%s166 + $0x8] sm:$0xf]
      %v181 = vld [vmem:[%s166 + $0xc] sm:$0xf]
      %v182 = vld [vmem:[%s166 + $0x10] sm:$0xf]
      %v183 = vld [vmem:[%s166 + $0x14] sm:$0xf]
      %v184 = vld [vmem:[%s166 + $0x18] sm:$0xf]
      %v185 = vld [vmem:[%s166 + $0x1c] sm:$0xf]
      %v186 = vld [vmem:[%s166 + $0x20] sm:$0xf]
      %v189 = vunpack.c.l.b16 %v176
      %v190 = vunpack.c.l.b16 %v177
      %v191 = vpack.c.b16 %v190, %v189
      %v201 = vunpack.c.l.b16 %v178
      %v202 = vunpack.c.l.b16 %v179
      %v203 = vunpack.c.l.b16 %v180
      %v204 = vunpack.c.l.b16 %v181
      %v205 = vunpack.c.l.b16 %v182
      %v206 = vunpack.c.l.b16 %v183
      %v207 = vunpack.c.l.b16 %v184
      %v208 = vunpack.c.l.b16 %v185
      %v209 = vunpack.c.l.b16 %v186
      %v210 = vpack.c.b16 %v202, %v201
      %v211 = vpack.c.b16 %v204, %v203
      %v212 = vpack.c.b16 %v206, %v205
      %v213 = vpack.c.b16 %v208, %v207
      %v214 = vpack.c.b16 %v209, %v209
      %vm219 = vcmask 588800
      %v221 = vsel %vm219, %v191, 0
      %vm223 = vcmask 1043456
      %v225 = vsel %vm223, %v214, 0
      %227 = vmatprep.subr.bf16.mxu0 0
      %228 = vmatpush1.bf16.msra.mxu0 %v210
      %229 = vmatprep.subr.bf16.mxu0 0
      %230 = vmatpush1.bf16.msra.mxu0 %v211
      %231 = vmatprep.subr.bf16.mxu0 0
      %232 = vmatpush1.bf16.msra.mxu0 %v212
      %233 = vmatprep.subr.bf16.mxu0 0
      %234 = vmatpush1.bf16.msra.mxu0 %v213
      %235 = vmatprep.subr.bf16.mxu0 0
      %236 = vmatpush1.bf16.msra.mxu0 %v225
      %237 = vmatprep.subr.bf16.mxu0 0
      %238 = vmatpush1.bf16.msra.mxu0 0
      %239 = vmatprep.subr.bf16.mxu0 0
      %240 = vmatpush1.bf16.msra.mxu0 0
      %241 = vmatprep.subr.bf16.mxu0 0
      %242 = vmatpush1.bf16.msra.mxu0 0
      %243 = vmatprep.subr.bf16.mxu0 0
      %244 = vmatpush1.bf16.msra.mxu0 0
      %245 = vmatprep.subr.bf16.mxu0 0
      %246 = vmatpush1.bf16.msra.mxu0 0
      %247 = vmatprep.subr.bf16.mxu0 0
      %248 = vmatpush1.bf16.msra.mxu0 0
      %249 = vmatprep.subr.bf16.mxu0 0
      %250 = vmatpush1.bf16.msra.mxu0 0
      %251 = vmatprep.subr.bf16.mxu0 0
      %252 = vmatpush1.bf16.msra.mxu0 0
      %253 = vmatprep.subr.bf16.mxu0 0
      %254 = vmatpush1.bf16.msra.mxu0 0
      %255 = vmatprep.subr.bf16.mxu0 0
      %256 = vmatpush1.bf16.msra.mxu0 0
      %257 = vmatprep.subr.bf16.mxu0 0
      %258 = vmatpush1.bf16.msra.mxu0 0
      %259 = vmatprep.mubr.bf16.mxu0 0
      %260 = vmatmul.mubr.bf16.gmra.mrb[0].mxu0 %v221
      %v261 = vpop.f32.mrb[0].mxu0
      %v262 = vadd.f32 0.0, %v261
      %v263 = vpop.f32.mrb[0].mxu0
      %v264 = vpop.f32.mrb[0].mxu0
      %v265 = vadd.f32 0.0, %v264
      %v266 = vpop.f32.mrb[0].mxu0
      %267 = vdwg.mxu0
      %s268 = scalar_lea.vmem %s166, 36
      %v269 = vld [vmem:[%s268] sm:$0xf]
      %v270 = vld [vmem:[%s268 + $0x4] sm:$0xf]
      %v271 = vld [vmem:[%s268 + $0x8] sm:$0xf]
      %v272 = vld [vmem:[%s268 + $0xc] sm:$0xf]
      %v273 = vld [vmem:[%s268 + $0x10] sm:$0xf]
      %v274 = vld [vmem:[%s268 + $0x14] sm:$0xf]
      %v275 = vld [vmem:[%s268 + $0x18] sm:$0xf]
      %v276 = vld [vmem:[%s268 + $0x1c] sm:$0xf]
      %v277 = vld [vmem:[%s268 + $0x20] sm:$0xf]
      %v287 = vunpack.c.l.b16 %v269
      %v288 = vunpack.c.l.b16 %v270
      %v289 = vunpack.c.l.b16 %v271
      %v290 = vunpack.c.l.b16 %v272
      %v291 = vunpack.c.l.b16 %v273
      %v292 = vunpack.c.l.b16 %v274
      %v293 = vunpack.c.l.b16 %v275
      %v294 = vunpack.c.l.b16 %v276
      %v295 = vunpack.c.l.b16 %v277
      %v296 = vpack.c.b16 %v288, %v287
      %v297 = vpack.c.b16 %v290, %v289
      %v298 = vpack.c.b16 %v292, %v291
      %v299 = vpack.c.b16 %v294, %v293
      %v300 = vpack.c.b16 %v295, %v295
      %v306 = vsel %vm223, %v300, 0
      %308 = vmatprep.subr.bf16.mxu0 0
      %309 = vmatpush1.bf16.msra.mxu0 %v296
      %310 = vmatprep.subr.bf16.mxu0 0
      %311 = vmatpush1.bf16.msra.mxu0 %v297
      %312 = vmatprep.subr.bf16.mxu0 0
      %313 = vmatpush1.bf16.msra.mxu0 %v298
      %314 = vmatprep.subr.bf16.mxu0 0
      %315 = vmatpush1.bf16.msra.mxu0 %v299
      %316 = vmatprep.subr.bf16.mxu0 0
      %317 = vmatpush1.bf16.msra.mxu0 %v306
      %318 = vmatprep.subr.bf16.mxu0 0
      %319 = vmatpush1.bf16.msra.mxu0 0
      %320 = vmatprep.subr.bf16.mxu0 0
      %321 = vmatpush1.bf16.msra.mxu0 0
      %322 = vmatprep.subr.bf16.mxu0 0
      %323 = vmatpush1.bf16.msra.mxu0 0
      %324 = vmatprep.subr.bf16.mxu0 0
      %325 = vmatpush1.bf16.msra.mxu0 0
      %326 = vmatprep.subr.bf16.mxu0 0
      %327 = vmatpush1.bf16.msra.mxu0 0
      %328 = vmatprep.subr.bf16.mxu0 0
      %329 = vmatpush1.bf16.msra.mxu0 0
      %330 = vmatprep.subr.bf16.mxu0 0
      %331 = vmatpush1.bf16.msra.mxu0 0
      %332 = vmatprep.subr.bf16.mxu0 0
      %333 = vmatpush1.bf16.msra.mxu0 0
      %334 = vmatprep.subr.bf16.mxu0 0
      %335 = vmatpush1.bf16.msra.mxu0 0
      %336 = vmatprep.subr.bf16.mxu0 0
      %337 = vmatpush1.bf16.msra.mxu0 0
      %338 = vmatprep.subr.bf16.mxu0 0
      %339 = vmatpush1.bf16.msra.mxu0 0
      %340 = vmatprep.mubr.bf16.mxu0 0
      %341 = vmatmul.mubr.bf16.gmra.mrb[0].mxu0 %v221
      %v342 = vpop.f32.mrb[0].mxu0
      %v343 = vadd.f32 0.0, %v342
      %v344 = vpop.f32.mrb[0].mxu0
      %v345 = vpop.f32.mrb[0].mxu0
      %v346 = vadd.f32 0.0, %v345
      %v347 = vpop.f32.mrb[0].mxu0
      %348 = vdwg.mxu0
      %v349 = vmax.f32 %v262, %v343
      %v350 = vmax.f32 %v265, %v346
      %351 = vst [vmem:[%s174] sm:$0xff] %v349
      %352 = vst [vmem:[%s174 + $0x8] sm:$0xff] %v350
      %p353 = scmp.lt.s32.totalorder %s17, 1
      %s354 = scalar_select %p353, %s17, 1
      %p355 = scmp.lt.s32.totalorder %s18, 0
      %s356 = scalar_select %p355, %s18, 0
      %s357 = smul.addr %s354, 2
      %s358 = sadd.s32 %s356, %s357
      %s359 = smul.addr %s358, 8
      %s360 = scalar_lea.vmem %s2, %s359
      // Predicated region
      $region29: #{_lambda_.3} parent=27 // pred_check
        %p361 = pneg %p94
      $region30: #{_lambda_.3} parent=27 // pred_check_branch
        %363 = sbr.rel (%p361) target = $region32
      $region31: #{_lambda_.3} parent=27 // pred_region
        _
      $region32: #{_lambda_.3} parent=27 // pred_fallthru
        _
    $region28: #{_lambda_.3} parent=5 // pred_fallthru
      _
    %p364 = scmp.le.s32.totalorder 2, %s8
    // Predicated region
    $region33: #{_lambda_.3} parent=5 // pred_check
      %p365 = pneg %p364
    $region34: #{_lambda_.3} parent=5 // pred_check_branch
      %367 = sbr.rel (%p365) target = $region36
    $region35: #{_lambda_.3} parent=5 // pred_region
      %s368 = ssub.s32 %s8, 2
      // Predicated region
      $region37: #{_lambda_.3} parent=35 // pred_check
        %p369 = pneg %p100
      $region38: #{_lambda_.3} parent=35 // pred_check_branch
        %371 = sbr.rel (%p369) target = $region40
      $region39: #{_lambda_.3} parent=35 // pred_region
        %p372 = scmp.lt.s32.totalorder %s19, 1
        %s373 = scalar_select %p372, %s19, 1
        %p374 = scmp.lt.s32.totalorder %s20, 0
        %s375 = scalar_select %p374, %s20, 0
        %s376 = smul.addr %s373, 2
        %s377 = sadd.s32 %s375, %s376
        %s378 = smul.addr %s377, 8
        %s379 = scalar_lea.vmem %s2, %s378
      $region40: #{_lambda_.3} parent=35 // pred_fallthru
        _
    $region36: #{_lambda_.3} parent=5 // pred_fallthru
      _
  $region6: #{_lambda_.3} parent=0 // loop_footer
    %s12 = sadd.s32 1, %s8
  $region7: #{_lambda_.3} parent=0 // loop_footer_branch
    %7 = sbr.rel target = $region3
  $region8: #{_lambda_.3} parent=0 // loop_exit
    _

</llo_original>
